<compile_context>
chip_gen: v5e
topology: v5e:2x2
jax: 0.10.0
libtpu: 0.0.40
codegen_flags: <defaults>
</compile_context>

<pallas_src>
import functools

import jax
import jax.numpy as jnp
from jax.experimental import pallas as pl
from jax.experimental.pallas import tpu as pltpu


def _round_up(n, m):
    return ((n + m - 1) // m) * m


# -----------------------------------------------------------------------------
# Kernel
# -----------------------------------------------------------------------------
def _acnet_fused_kernel(num_outputs,
                        x_ref, w0_ref, b0_ref, w1_ref, b1_ref, wh_ref, bh_ref,
                        out_ref):
    """Fused policy+value MLP on one (TB, num_inputs) batch tile.

    Weights are block-diagonal / concatenated so both branches run through the
    same three MXU matmuls. Output slab columns: [0:num_outputs] = tanh(mu_pre),
    [num_outputs] = v, rest = 0 (padding sliced off in the wrapper).
    """
    x = x_ref[...]

    # layer 0 (policy fc0 | value fc0 concatenated on the output axis)
    h = jnp.dot(x, w0_ref[...], preferred_element_type=jnp.float32) + b0_ref[...]
    h = jnp.maximum(h, 0.0).astype(w1_ref.dtype)

    # layer 1 (block-diagonal: policy fc1 / value fc1)
    h = jnp.dot(h, w1_ref[...], preferred_element_type=jnp.float32) + b1_ref[...]
    h = jnp.maximum(h, 0.0).astype(wh_ref.dtype)

    # fused head: columns [0:no] <- mu weights, column [no] <- value weight
    head = jnp.dot(h, wh_ref[...], preferred_element_type=jnp.float32) + bh_ref[...]

    # tanh only on the mu lanes; v lane (and zero padding) passes through.
    lane = jax.lax.broadcasted_iota(jnp.int32, head.shape, dimension=1)
    out = jnp.where(lane < num_outputs, jnp.tanh(head), head)
    out_ref[...] = out.astype(out_ref.dtype)


# -----------------------------------------------------------------------------
# Parameter packing (fuse policy + value branches, pad to lane-friendly widths)
# -----------------------------------------------------------------------------
def pack_params(params, compute_dtype=jnp.float32):
    """Packs per-branch (in, out) weights into fused, lane-padded matrices."""
    pw0, pb0 = params["pw0"], params["pb0"]
    pw1, pb1 = params["pw1"], params["pb1"]
    muw, mub = params["muw"], params["mub"]
    vw0, vb0 = params["vw0"], params["vb0"]
    vw1, vb1 = params["vw1"], params["vb1"]
    vw, vb = params["vw"], params["vb"]

    num_inputs = pw0.shape[0]
    hp0, hp1 = pw0.shape[1], pw1.shape[1]
    hv0, hv1 = vw0.shape[1], vw1.shape[1]
    no = muw.shape[1]

    h0 = _round_up(hp0 + hv0, 128)      # 64+128 -> 256
    h1 = _round_up(hp1 + hv1, 128)      # 64+128 -> 256
    head_w = _round_up(no + 1, 128)     # mu lanes + 1 value lane -> 128

    w0 = jnp.zeros((num_inputs, h0), jnp.float32)
    w0 = w0.at[:, :hp0].set(pw0).at[:, hp0:hp0 + hv0].set(vw0)
    b0 = jnp.zeros((1, h0), jnp.float32)
    b0 = b0.at[:, :hp0].set(pb0).at[:, hp0:hp0 + hv0].set(vb0)

    w1 = jnp.zeros((h0, h1), jnp.float32)
    w1 = w1.at[:hp0, :hp1].set(pw1).at[hp0:hp0 + hv0, hp1:hp1 + hv1].set(vw1)
    b1 = jnp.zeros((1, h1), jnp.float32)
    b1 = b1.at[:, :hp1].set(pb1).at[:, hp1:hp1 + hv1].set(vb1)

    wh = jnp.zeros((h1, head_w), jnp.float32)
    wh = wh.at[:hp1, :no].set(muw).at[hp1:hp1 + hv1, no:no + 1].set(vw)
    bh = jnp.zeros((1, head_w), jnp.float32)
    bh = bh.at[:, :no].set(mub).at[:, no:no + 1].set(vb)

    return {
        # matmul operands in compute dtype (bf16 for MXU throughput if desired),
        # biases kept f32 (post-matmul math stays in f32).
        "w0": w0.astype(compute_dtype), "b0": b0,
        "w1": w1.astype(compute_dtype), "b1": b1,
        "wh": wh.astype(compute_dtype), "bh": bh,
        "num_outputs": no,
        "num_inputs": num_inputs,
    }


# -----------------------------------------------------------------------------
# Wrapper
# -----------------------------------------------------------------------------
def actor_critic_forward(x, packed, noise=0.0, *, tb=None):
    """Runs the fused ActorCriticNet forward pass.

    Args:
      x: (B, num_inputs) float32 observations.
      packed: output of pack_params().
      noise: scalar noise value (module default 0 -> log_std == 0).
      tb: batch tile size (multiple of 8). Default min(512, round_up(B, 8)).
    Returns:
      (mu, log_std, v) with shapes (B, no), (B, no), (B, 1), all float32.
    """
    B, num_inputs = x.shape
    assert num_inputs == packed["num_inputs"]
    no = packed["num_outputs"]
    head_w = packed["wh"].shape[1]
    compute_dtype = packed["w0"].dtype

    if tb is None:
        tb = min(512, _round_up(B, 8))
    tb = max(8, _round_up(min(tb, _round_up(B, 8)), 8))
    b_pad = _round_up(B, tb)

    x = x.astype(compute_dtype)
    if b_pad != B:
        x = jnp.pad(x, ((0, b_pad - B), (0, 0)))

    const_map = lambda i: (0, 0)
    in_specs = [
        pl.BlockSpec((tb, num_inputs), lambda i: (i, 0)),        # x: tiled on batch
        pl.BlockSpec(packed["w0"].shape, const_map),             # weights/biases:
        pl.BlockSpec(packed["b0"].shape, const_map),             # resident across
        pl.BlockSpec(packed["w1"].shape, const_map),             # grid steps
        pl.BlockSpec(packed["b1"].shape, const_map),
        pl.BlockSpec(packed["wh"].shape, const_map),
        pl.BlockSpec(packed["bh"].shape, const_map),
    ]
    out_spec = pl.BlockSpec((tb, head_w), lambda i: (i, 0))
    out_shape = jax.ShapeDtypeStruct((b_pad, head_w), jnp.float32)

    slab = pl.pallas_call(
        functools.partial(_acnet_fused_kernel, no),
        grid=(b_pad // tb,),
        in_specs=in_specs,
        out_specs=out_spec,
        out_shape=out_shape,
        compiler_params=pltpu.CompilerParams(
            dimension_semantics=("parallel",)),  # megacore sharding on v7x
    )(x, packed["w0"], packed["b0"], packed["w1"], packed["b1"],
      packed["wh"], packed["bh"])

    mu = slab[:B, :no]
    v = slab[:B, no:no + 1]
    # log_std is a constant fill -> done outside the kernel (free in XLA).
    log_std = jnp.full((B, no), noise, dtype=mu.dtype)
    return mu, log_std, v


# -----------------------------------------------------------------------------
# Init + pure-JAX reference
# -----------------------------------------------------------------------------
def init_params(key, num_inputs, num_outputs,
                hidden_layer=(64, 64), hidden_layer_v=(128, 128),
                gain=0.1):
    """Deterministic synthetic init mirroring the module's layer shapes.

    (PyTorch module uses orthogonal init with gain 0.1; here scaled normal init
    with the same shapes, deterministically seeded.)
    """
    keys = jax.random.split(key, 12)

    def w(k, fan_in, fan_out):
        return (gain * jax.random.normal(k, (fan_in, fan_out), jnp.float32)
                / jnp.sqrt(jnp.float32(fan_in)))

    def b(k, fan_out):
        return gain * 0.01 * jax.random.normal(k, (1, fan_out), jnp.float32)

    h0, h1 = hidden_layer
    hv0, hv1 = hidden_layer_v
    return {
        "pw0": w(keys[0], num_inputs, h0), "pb0": b(keys[1], h0),
        "pw1": w(keys[2], h0, h1),         "pb1": b(keys[3], h1),
        "muw": w(keys[4], h1, num_outputs), "mub": b(keys[5], num_outputs),
        "vw0": w(keys[6], num_inputs, hv0), "vb0": b(keys[7], hv0),
        "vw1": w(keys[8], hv0, hv1),        "vb1": b(keys[9], hv1),
        "vw":  w(keys[10], hv1, 1),         "vb":  b(keys[11], 1),
    }


def _reference_forward(x, params, noise=0.0):
    h = jax.nn.relu(x @ params["pw0"] + params["pb0"])
    h = jax.nn.relu(h @ params["pw1"] + params["pb1"])
    mu = jnp.tanh(h @ params["muw"] + params["mub"])
    log_std = noise * jnp.ones_like(mu)
    g = jax.nn.relu(x @ params["vw0"] + params["vb0"])
    g = jax.nn.relu(g @ params["vw1"] + params["vb1"])
    v = g @ params["vw"] + params["vb"]
    return mu, log_std, v


if __name__ == "__main__":
    key = jax.random.PRNGKey(0)
    k_params, k_x = jax.random.split(key)

    batch = 256          # big enough to exercise the batch grid (2 tiles of 128)
    num_inputs = 32
    num_outputs = 8

    params = init_params(k_params, num_inputs, num_outputs)
    x = jax.random.normal(k_x, (batch, num_inputs), jnp.float32)
    mu_ref, log_std_ref, v_ref = _reference_forward(x, params, noise=0.0)

    # --- f32 path: tight correctness check ---
    packed_f32 = pack_params(params, jnp.float32)
    mu, log_std, v = actor_critic_forward(x, packed_f32, noise=0.0, tb=128)
    jax.block_until_ready((mu, log_std, v))

    assert mu.shape == (batch, num_outputs)
    assert log_std.shape == (batch, num_outputs)
    assert v.shape == (batch, 1)
    assert jnp.allclose(mu, mu_ref, atol=1e-4, rtol=1e-4)
    assert jnp.allclose(log_std, log_std_ref, atol=1e-6)
    assert jnp.allclose(v, v_ref, atol=1e-4, rtol=1e-4)

    # --- bf16 weights path (MXU throughput config): looser tolerance ---
    packed_bf16 = pack_params(params, jnp.bfloat16)
    mu16, log_std16, v16 = actor_critic_forward(x, packed_bf16, noise=0.0, tb=128)
    jax.block_until_ready((mu16, log_std16, v16))
    assert jnp.allclose(mu16, mu_ref, atol=5e-2, rtol=5e-2)
    assert jnp.allclose(v16, v_ref, atol=5e-2, rtol=5e-2)
    assert jnp.allclose(log_std16, log_std_ref, atol=1e-6)

    print("KERNEL_OK")
</pallas_src>

<mosaic_0001>
module attributes {stable_mosaic.version = 11 : i64} {
  func.func @_acnet_fused_kernel(%arg0: i32, %arg1: memref<128x32xf32, #tpu.memory_space<vmem>>, %arg2: memref<32x256xf32, #tpu.memory_space<vmem>>, %arg3: memref<1x256xf32, #tpu.memory_space<vmem>>, %arg4: memref<256x256xf32, #tpu.memory_space<vmem>>, %arg5: memref<1x256xf32, #tpu.memory_space<vmem>>, %arg6: memref<256x128xf32, #tpu.memory_space<vmem>>, %arg7: memref<1x128xf32, #tpu.memory_space<vmem>>, %arg8: memref<128x128xf32, #tpu.memory_space<vmem>>) attributes {dimension_semantics = [#tpu.dimension_semantics<parallel>], iteration_bounds = array<i64: 2>, scalar_prefetch = 0 : i64, scratch_operands = 0 : i64, tpu.core_type = #tpu.core_type<tc>, window_params = [{transform_indices = @transform_0, window_bounds = array<i64: 128, 32>}, {pipeline_mode = #tpu.pipeline_mode<synchronous>, transform_indices = @transform_1, window_bounds = array<i64: 32, 256>}, {pipeline_mode = #tpu.pipeline_mode<synchronous>, transform_indices = @transform_2, window_bounds = array<i64: 1, 256>}, {pipeline_mode = #tpu.pipeline_mode<synchronous>, transform_indices = @transform_3, window_bounds = array<i64: 256, 256>}, {pipeline_mode = #tpu.pipeline_mode<synchronous>, transform_indices = @transform_4, window_bounds = array<i64: 1, 256>}, {pipeline_mode = #tpu.pipeline_mode<synchronous>, transform_indices = @transform_5, window_bounds = array<i64: 256, 128>}, {pipeline_mode = #tpu.pipeline_mode<synchronous>, transform_indices = @transform_6, window_bounds = array<i64: 1, 128>}, {transform_indices = @transform_7, window_bounds = array<i64: 128, 128>}]} {
    %c0 = arith.constant 0 : index
    %c0_0 = arith.constant 0 : index
    %0 = vector.load %arg1[%c0, %c0_0] : memref<128x32xf32, #tpu.memory_space<vmem>>, vector<128x32xf32>
    %c0_1 = arith.constant 0 : index
    %c0_2 = arith.constant 0 : index
    %1 = vector.load %arg2[%c0_1, %c0_2] : memref<32x256xf32, #tpu.memory_space<vmem>>, vector<32x256xf32>
    %cst = arith.constant dense<0.000000e+00> : vector<128x256xf32>
    %2 = tpu.matmul %0, %1, %cst {dimension_numbers = #tpu.dot_dimension_numbers<[1], [0], [0], [1], [0, 0, 1, 1], [], []>} : vector<128x32xf32>, vector<32x256xf32>, vector<128x256xf32> -> vector<128x256xf32>
    %c0_3 = arith.constant 0 : index
    %c0_4 = arith.constant 0 : index
    %3 = vector.load %arg3[%c0_3, %c0_4] : memref<1x256xf32, #tpu.memory_space<vmem>>, vector<1x256xf32>
    %4 = vector.broadcast %3 : vector<1x256xf32> to vector<128x256xf32>
    %5 = arith.addf %2, %4 : vector<128x256xf32>
    %cst_5 = arith.constant 0.000000e+00 : f32
    %6 = vector.broadcast %cst_5 : f32 to vector<128x256xf32>
    %7 = arith.maximumf %5, %6 : vector<128x256xf32>
    %c0_6 = arith.constant 0 : index
    %c0_7 = arith.constant 0 : index
    %8 = vector.load %arg4[%c0_6, %c0_7] : memref<256x256xf32, #tpu.memory_space<vmem>>, vector<256x256xf32>
    %cst_8 = arith.constant dense<0.000000e+00> : vector<128x256xf32>
    %9 = tpu.matmul %7, %8, %cst_8 {dimension_numbers = #tpu.dot_dimension_numbers<[1], [0], [0], [1], [0, 0, 1, 1], [], []>} : vector<128x256xf32>, vector<256x256xf32>, vector<128x256xf32> -> vector<128x256xf32>
    %c0_9 = arith.constant 0 : index
    %c0_10 = arith.constant 0 : index
    %10 = vector.load %arg5[%c0_9, %c0_10] : memref<1x256xf32, #tpu.memory_space<vmem>>, vector<1x256xf32>
    %11 = vector.broadcast %10 : vector<1x256xf32> to vector<128x256xf32>
    %12 = arith.addf %9, %11 : vector<128x256xf32>
    %cst_11 = arith.constant 0.000000e+00 : f32
    %13 = vector.broadcast %cst_11 : f32 to vector<128x256xf32>
    %14 = arith.maximumf %12, %13 : vector<128x256xf32>
    %c0_12 = arith.constant 0 : index
    %c0_13 = arith.constant 0 : index
    %15 = vector.load %arg6[%c0_12, %c0_13] : memref<256x128xf32, #tpu.memory_space<vmem>>, vector<256x128xf32>
    %cst_14 = arith.constant dense<0.000000e+00> : vector<128x128xf32>
    %16 = tpu.matmul %14, %15, %cst_14 {dimension_numbers = #tpu.dot_dimension_numbers<[1], [0], [0], [1], [0, 0, 1, 1], [], []>} : vector<128x256xf32>, vector<256x128xf32>, vector<128x128xf32> -> vector<128x128xf32>
    %c0_15 = arith.constant 0 : index
    %c0_16 = arith.constant 0 : index
    %17 = vector.load %arg7[%c0_15, %c0_16] : memref<1x128xf32, #tpu.memory_space<vmem>>, vector<1x128xf32>
    %18 = vector.broadcast %17 : vector<1x128xf32> to vector<128x128xf32>
    %19 = arith.addf %16, %18 : vector<128x128xf32>
    %20 = tpu.iota {dimensions = array<i32: 1>} : vector<128x128xi32>
    %c8_i32 = arith.constant 8 : i32
    %21 = vector.broadcast %c8_i32 : i32 to vector<128x128xi32>
    %22 = arith.cmpi slt, %20, %21 : vector<128x128xi32>
    %23 = math.tanh %19 : vector<128x128xf32>
    %24 = arith.select %22, %23, %19 : vector<128x128xi1>, vector<128x128xf32>
    %c0_17 = arith.constant 0 : index
    %c0_18 = arith.constant 0 : index
    %25 = vector.load %arg8[%c0_17, %c0_18] : memref<128x128xf32, #tpu.memory_space<vmem>>, vector<128x128xf32>
    tpu.vector_store %arg8[%c0_17, %c0_18], %24 {strides = array<i32>} : memref<128x128xf32, #tpu.memory_space<vmem>>, vector<128x128xf32>,
    return
  }
  func.func @transform_0(%arg0: i32) -> (i32, i32) {
    %c0_i32 = arith.constant 0 : i32
    %c0_i32_0 = arith.constant 0 : i32
    return %arg0, %c0_i32 : i32, i32
  }
  func.func @transform_1(%arg0: i32) -> (i32, i32) {
    %c0_i32 = arith.constant 0 : i32
    %c0_i32_0 = arith.constant 0 : i32
    %c0_i32_1 = arith.constant 0 : i32
    return %c0_i32, %c0_i32_0 : i32, i32
  }
  func.func @transform_2(%arg0: i32) -> (i32, i32) {
    %c0_i32 = arith.constant 0 : i32
    %c0_i32_0 = arith.constant 0 : i32
    %c0_i32_1 = arith.constant 0 : i32
    return %c0_i32, %c0_i32_0 : i32, i32
  }
  func.func @transform_3(%arg0: i32) -> (i32, i32) {
    %c0_i32 = arith.constant 0 : i32
    %c0_i32_0 = arith.constant 0 : i32
    %c0_i32_1 = arith.constant 0 : i32
    return %c0_i32, %c0_i32_0 : i32, i32
  }
  func.func @transform_4(%arg0: i32) -> (i32, i32) {
    %c0_i32 = arith.constant 0 : i32
    %c0_i32_0 = arith.constant 0 : i32
    %c0_i32_1 = arith.constant 0 : i32
    return %c0_i32, %c0_i32_0 : i32, i32
  }
  func.func @transform_5(%arg0: i32) -> (i32, i32) {
    %c0_i32 = arith.constant 0 : i32
    %c0_i32_0 = arith.constant 0 : i32
    %c0_i32_1 = arith.constant 0 : i32
    return %c0_i32, %c0_i32_0 : i32, i32
  }
  func.func @transform_6(%arg0: i32) -> (i32, i32) {
    %c0_i32 = arith.constant 0 : i32
    %c0_i32_0 = arith.constant 0 : i32
    %c0_i32_1 = arith.constant 0 : i32
    return %c0_i32, %c0_i32_0 : i32, i32
  }
  func.func @transform_7(%arg0: i32) -> (i32, i32) {
    %c0_i32 = arith.constant 0 : i32
    %c0_i32_0 = arith.constant 0 : i32
    return %arg0, %c0_i32 : i32, i32
  }
}

</mosaic_0001>

<llo_original>
// kernel: tpu_custom_call.1
$region0: #{tpu_custom_call.1}
  #allocation0 [shape = 'u32[]', space=smem, size = 0x4, offset = 0x4, fixed_abs, tag = 'smem constant byte address 0x4 - core index']
  #allocation1 [shape = 'u32[72,128]{1,0:T(1,128)}', space=vmem, size = 0x9000, scoped, tag = 'internal scratch']
  %s0 = inlined_call_operand.vmem [shape: f32[256,32], index: 0, kind: input, shape index: {}]
  %s1 = inlined_call_operand.vmem [shape: f32[32,256], index: 1, kind: input, shape index: {}]
  %s2 = inlined_call_operand.vmem [shape: f32[1,256], index: 2, kind: input, shape index: {}]
  %s3 = inlined_call_operand.hbm [shape: f32[256,256], index: 3, kind: input, shape index: {}]
  %s4 = inlined_call_operand.vmem [shape: f32[1,256], index: 4, kind: input, shape index: {}]
  %s5 = inlined_call_operand.vmem [shape: f32[256,128], index: 5, kind: input, shape index: {}]
  %s6 = inlined_call_operand.hbm [shape: f32[1,128], index: 6, kind: input, shape index: {}]
  %s7 = inlined_call_operand.hbm [shape: f32[256,128], index: 7, kind: output, shape index: {}]
  %s8 = sld [smem:[#allocation0]]
  $region69: #{tpu_custom_call.1} parent=0
    _
  %s10 = ssub.s32 1, %s8
  %s11 = scalar_select 0, %s10, %s8
  $region1: #{tpu_custom_call.1} parent=0
    #allocation2 [shape = 'u8[262144]{0}', space=vmem, size = 0x40000, scoped, tag = 'input window, operand 3, single buffered']
    #allocation3 [shape = 's32[2]{0}', space=sflag, size = 0x8, scoped, tag = 'scoped memory for tpu_custom_call.1']
    #allocation4 [shape = 's32[2]{0}', space=sflag, size = 0x8, scoped, tag = 'scoped memory for tpu_custom_call.1']
    #allocation5 [shape = 'u8[512]{0}', space=vmem, size = 0x400, scoped, tag = 'input window, operand 6, single buffered']
    #allocation6 [shape = 's32[1]{0}', space=sflag, size = 0x4, scoped, tag = 'scoped memory for tpu_custom_call.1']
    #allocation7 [shape = 'u8[131072]{0}', space=vmem, size = 0x20000, scoped, tag = 'output window, operand 0']
    %12 = vsyncpa [#allocation3], 0
    %13 = vsyncpa [#allocation6], 0
    %14 = vsyncpa [#allocation4], 0
    %s15 = scalar_lea.sflag [#allocation4], 1
    %16 = vsyncpa %s15, 0
    loop: start=0, step=1, limit=4
    $region2: #{tpu_custom_call.1} parent=1 // loop_pre_header
      _
    $region3: #{tpu_custom_call.1} parent=1 // loop_header
      %s18 = sphi 0, %s22
      %p19 = scmp.ge.s32.totalorder %s18, 4
      %s28 = sphi 0, %s30
      %s31 = sphi 0, %s28
      %s32 = sphi 0, %s31
      %s48 = sphi 0, %s32
      %s52 = sphi 0, %s52
      %s54 = sphi 0, %s52
      %s55 = sphi 0, %s54
      %s69 = sphi 0, %s55
      %s73 = sphi 0, %s73
      %s75 = sphi 0, %s73
      %s76 = sphi 0, %s75
      %s90 = sphi 0, %s76
      %s94 = sphi 0, %s94
      %s96 = sphi 0, %s94
      %s97 = sphi 0, %s96
      %s111 = sphi 0, %s97
      %s115 = sphi 0, %s115
      %s117 = sphi 0, %s115
      %s118 = sphi 0, %s117
      %s132 = sphi 0, %s118
      %s136 = sphi 0, %s136
      %s138 = sphi 0, %s136
      %s139 = sphi 0, %s138
      %s153 = sphi 0, %s139
      %s157 = sphi 0, %s157
      %s159 = sphi 0, %s157
      %s160 = sphi 0, %s159
      %s174 = sphi 0, %s160
      %s180 = sphi 0, %s182
      %s183 = sphi 0, %s180
      %s184 = sphi 0, %s183
      %s200 = sphi 0, %s184
    $region4: #{tpu_custom_call.1} parent=1 // loop_header_branch
      %21 = sbr.rel (%p19) target = $region8
    $region5: #{tpu_custom_call.1} parent=1 // loop_body
      %s23 = ssub.s32 %s18, 1
      %s24 = ssub.s32 %s18, 2
      %s25 = sadd.s32 %s18, 1
      %s26 = ssub.s32 %s18, %s25
      %p27 = scmp.eq.s32.totalorder %s26, 0
      %s29 = sadd.s32 %s28, 1
      %s30 = scalar_select %p27, %s28, %s29
      %p33 = pneg %p27
      %p34 = scmp.eq.s32.totalorder %s18, 1
      %p35 = por %p33, %p34
      %p36 = scmp.ne.s32.totalorder %s28, %s31
      %p37 = scmp.eq.s32.totalorder %s18, 0
      %p38 = por %p36, %p37
      %p39 = scmp.ne.s32.totalorder %s28, %s31
      %p40 = scmp.eq.s32.totalorder %s23, 1
      %p41 = por %p39, %p40
      %p42 = scmp.ne.s32.totalorder %s31, %s32
      %p43 = scmp.eq.s32.totalorder %s23, 0
      %p44 = por %p42, %p43
      %p45 = scmp.ne.s32.totalorder %s31, %s32
      %p46 = scmp.eq.s32.totalorder %s24, 1
      %p47 = por %p45, %p46
      %p49 = scmp.ne.s32.totalorder %s32, %s48
      %p50 = scmp.eq.s32.totalorder %s24, 0
      %p51 = por %p49, %p50
      %s53 = sadd.s32 %s52, 1
      %p56 = scmp.eq.s32.totalorder %s18, 1
      %p57 = scmp.ne.s32.totalorder %s52, %s54
      %p58 = scmp.eq.s32.totalorder %s18, 0
      %p59 = por %p57, %p58
      %p60 = scmp.ne.s32.totalorder %s52, %s54
      %p61 = scmp.eq.s32.totalorder %s23, 1
      %p62 = por %p60, %p61
      %p63 = scmp.ne.s32.totalorder %s54, %s55
      %p64 = scmp.eq.s32.totalorder %s23, 0
      %p65 = por %p63, %p64
      %p66 = scmp.ne.s32.totalorder %s54, %s55
      %p67 = scmp.eq.s32.totalorder %s24, 1
      %p68 = por %p66, %p67
      %p70 = scmp.ne.s32.totalorder %s55, %s69
      %p71 = scmp.eq.s32.totalorder %s24, 0
      %p72 = por %p70, %p71
      %s74 = sadd.s32 %s73, 1
      %p77 = scmp.eq.s32.totalorder %s18, 1
      %p78 = scmp.ne.s32.totalorder %s73, %s75
      %p79 = scmp.eq.s32.totalorder %s18, 0
      %p80 = por %p78, %p79
      %p81 = scmp.ne.s32.totalorder %s73, %s75
      %p82 = scmp.eq.s32.totalorder %s23, 1
      %p83 = por %p81, %p82
      %p84 = scmp.ne.s32.totalorder %s75, %s76
      %p85 = scmp.eq.s32.totalorder %s23, 0
      %p86 = por %p84, %p85
      %p87 = scmp.ne.s32.totalorder %s75, %s76
      %p88 = scmp.eq.s32.totalorder %s24, 1
      %p89 = por %p87, %p88
      %p91 = scmp.ne.s32.totalorder %s76, %s90
      %p92 = scmp.eq.s32.totalorder %s24, 0
      %p93 = por %p91, %p92
      %s95 = sadd.s32 %s94, 1
      %p98 = scmp.eq.s32.totalorder %s18, 1
      %p99 = scmp.ne.s32.totalorder %s94, %s96
      %p100 = scmp.eq.s32.totalorder %s18, 0
      %p101 = por %p99, %p100
      %p102 = scmp.ne.s32.totalorder %s94, %s96
      %p103 = scmp.eq.s32.totalorder %s23, 1
      %p104 = por %p102, %p103
      %p105 = scmp.ne.s32.totalorder %s96, %s97
      %p106 = scmp.eq.s32.totalorder %s23, 0
      %p107 = por %p105, %p106
      %p108 = scmp.ne.s32.totalorder %s96, %s97
      %p109 = scmp.eq.s32.totalorder %s24, 1
      %p110 = por %p108, %p109
      %p112 = scmp.ne.s32.totalorder %s97, %s111
      %p113 = scmp.eq.s32.totalorder %s24, 0
      %p114 = por %p112, %p113
      %s116 = sadd.s32 %s115, 1
      %p119 = scmp.eq.s32.totalorder %s18, 1
      %p120 = scmp.ne.s32.totalorder %s115, %s117
      %p121 = scmp.eq.s32.totalorder %s18, 0
      %p122 = por %p120, %p121
      %p123 = scmp.ne.s32.totalorder %s115, %s117
      %p124 = scmp.eq.s32.totalorder %s23, 1
      %p125 = por %p123, %p124
      %p126 = scmp.ne.s32.totalorder %s117, %s118
      %p127 = scmp.eq.s32.totalorder %s23, 0
      %p128 = por %p126, %p127
      %p129 = scmp.ne.s32.totalorder %s117, %s118
      %p130 = scmp.eq.s32.totalorder %s24, 1
      %p131 = por %p129, %p130
      %p133 = scmp.ne.s32.totalorder %s118, %s132
      %p134 = scmp.eq.s32.totalorder %s24, 0
      %p135 = por %p133, %p134
      %s137 = sadd.s32 %s136, 1
      %p140 = scmp.eq.s32.totalorder %s18, 1
      %p141 = scmp.ne.s32.totalorder %s136, %s138
      %p142 = scmp.eq.s32.totalorder %s18, 0
      %p143 = por %p141, %p142
      %p144 = scmp.ne.s32.totalorder %s136, %s138
      %p145 = scmp.eq.s32.totalorder %s23, 1
      %p146 = por %p144, %p145
      %p147 = scmp.ne.s32.totalorder %s138, %s139
      %p148 = scmp.eq.s32.totalorder %s23, 0
      %p149 = por %p147, %p148
      %p150 = scmp.ne.s32.totalorder %s138, %s139
      %p151 = scmp.eq.s32.totalorder %s24, 1
      %p152 = por %p150, %p151
      %p154 = scmp.ne.s32.totalorder %s139, %s153
      %p155 = scmp.eq.s32.totalorder %s24, 0
      %p156 = por %p154, %p155
      %s158 = sadd.s32 %s157, 1
      %p161 = scmp.eq.s32.totalorder %s18, 1
      %p162 = scmp.ne.s32.totalorder %s157, %s159
      %p163 = scmp.eq.s32.totalorder %s18, 0
      %p164 = por %p162, %p163
      %p165 = scmp.ne.s32.totalorder %s157, %s159
      %p166 = scmp.eq.s32.totalorder %s23, 1
      %p167 = por %p165, %p166
      %p168 = scmp.ne.s32.totalorder %s159, %s160
      %p169 = scmp.eq.s32.totalorder %s23, 0
      %p170 = por %p168, %p169
      %p171 = scmp.ne.s32.totalorder %s159, %s160
      %p172 = scmp.eq.s32.totalorder %s24, 1
      %p173 = por %p171, %p172
      %p175 = scmp.ne.s32.totalorder %s160, %s174
      %p176 = scmp.eq.s32.totalorder %s24, 0
      %p177 = por %p175, %p176
      %s178 = ssub.s32 %s18, %s25
      %p179 = scmp.eq.s32.totalorder %s178, 0
      %s181 = sadd.s32 %s180, 1
      %s182 = scalar_select %p179, %s180, %s181
      %p185 = pneg %p179
      %p186 = scmp.eq.s32.totalorder %s18, 1
      %p187 = por %p185, %p186
      %p188 = scmp.ne.s32.totalorder %s180, %s183
      %p189 = scmp.eq.s32.totalorder %s18, 0
      %p190 = por %p188, %p189
      %p191 = scmp.ne.s32.totalorder %s180, %s183
      %p192 = scmp.eq.s32.totalorder %s23, 1
      %p193 = por %p191, %p192
      %p194 = scmp.ne.s32.totalorder %s183, %s184
      %p195 = scmp.eq.s32.totalorder %s23, 0
      %p196 = por %p194, %p195
      %p197 = scmp.ne.s32.totalorder %s183, %s184
      %p198 = scmp.eq.s32.totalorder %s24, 1
      %p199 = por %p197, %p198
      %p201 = scmp.ne.s32.totalorder %s184, %s200
      %p202 = scmp.eq.s32.totalorder %s24, 0
      %p203 = por %p201, %p202
      %p204 = scmp.le.s32.totalorder 1, %s18
      %p205 = scmp.lt.s32.totalorder %s18, 3
      %p206 = pnand %p204, %p205
      %p207 = pneg %p206
      // Predicated region
      $region9: #{tpu_custom_call.1} parent=5 // pred_check
        _
      $region10: #{tpu_custom_call.1} parent=5 // pred_check_branch
        %209 = sbr.rel (%p206) target = $region12
      $region11: #{tpu_custom_call.1} parent=5 // pred_region
        %s210 = ssub.s32 %s18, 1
        // Predicated region
        $region13: #{tpu_custom_call.1} parent=11 // pred_check
          %p211 = pneg %p65
        $region14: #{tpu_custom_call.1} parent=11 // pred_check_branch
          %213 = sbr.rel (%p211) target = $region16
        $region15: #{tpu_custom_call.1} parent=11 // pred_region
          _
        $region16: #{tpu_custom_call.1} parent=11 // pred_fallthru
          _
        // Predicated region
        $region17: #{tpu_custom_call.1} parent=11 // pred_check
          %p214 = pneg %p86
        $region18: #{tpu_custom_call.1} parent=11 // pred_check_branch
          %216 = sbr.rel (%p214) target = $region20
        $region19: #{tpu_custom_call.1} parent=11 // pred_region
          _
        $region20: #{tpu_custom_call.1} parent=11 // pred_fallthru
          _
        // Predicated region
        $region21: #{tpu_custom_call.1} parent=11 // pred_check
          %p217 = pneg %p107
        $region22: #{tpu_custom_call.1} parent=11 // pred_check_branch
          %219 = sbr.rel (%p217) target = $region24
        $region23: #{tpu_custom_call.1} parent=11 // pred_region
          %221 = vsyncadd [#allocation3], 0
          %s222 = sshll.u32 %s3, 4
          %s223 = int_to_ptr.hbm [resolvable:$true] %s222
          %s224 = sshll.u32 [#allocation2], 4
          %s225 = int_to_ptr.vmem [resolvable:$true] %s224
          %230 = dma.hbm_to_vmem [thread:$0]  %s223, 8192, %s225, [#allocation3], 256, 256, 16
        $region24: #{tpu_custom_call.1} parent=11 // pred_fallthru
          _
        // Predicated region
        $region25: #{tpu_custom_call.1} parent=11 // pred_check
          %p231 = pneg %p128
        $region26: #{tpu_custom_call.1} parent=11 // pred_check_branch
          %233 = sbr.rel (%p231) target = $region28
        $region27: #{tpu_custom_call.1} parent=11 // pred_region
          _
        $region28: #{tpu_custom_call.1} parent=11 // pred_fallthru
          _
        // Predicated region
        $region29: #{tpu_custom_call.1} parent=11 // pred_check
          %p234 = pneg %p149
        $region30: #{tpu_custom_call.1} parent=11 // pred_check_branch
          %236 = sbr.rel (%p234) target = $region32
        $region31: #{tpu_custom_call.1} parent=11 // pred_region
          _
        $region32: #{tpu_custom_call.1} parent=11 // pred_fallthru
          _
        // Predicated region
        $region33: #{tpu_custom_call.1} parent=11 // pred_check
          %p237 = pneg %p170
        $region34: #{tpu_custom_call.1} parent=11 // pred_check_branch
          %239 = sbr.rel (%p237) target = $region36
        $region35: #{tpu_custom_call.1} parent=11 // pred_region
          %241 = vsyncadd [#allocation6], 0
          %s243 = sshll.u32 %s6, 4
          %s244 = int_to_ptr.hbm [resolvable:$true] %s243
          %s245 = sshll.u32 [#allocation5], 4
          %s246 = int_to_ptr.vmem [resolvable:$true] %s245
          %248 = dma.hbm_to_vmem [thread:$0]  %s244, 16, %s246, [#allocation6]
        $region36: #{tpu_custom_call.1} parent=11 // pred_fallthru
          _
      $region12: #{tpu_custom_call.1} parent=5 // pred_fallthru
        _
      %p249 = scmp.lt.s32.totalorder %s18, 2
      // Predicated region
      $region37: #{tpu_custom_call.1} parent=5 // pred_check
        %p250 = pneg %p249
      $region38: #{tpu_custom_call.1} parent=5 // pred_check_branch
        %252 = sbr.rel (%p250) target = $region40
      $region39: #{tpu_custom_call.1} parent=5 // pred_region
        // Predicated region
        $region41: #{tpu_custom_call.1} parent=39 // pred_check
          %p253 = pneg %p38
        $region42: #{tpu_custom_call.1} parent=39 // pred_check_branch
          %255 = sbr.rel (%p253) target = $region44
        $region43: #{tpu_custom_call.1} parent=39 // pred_region
          %s256 = smul.u32 16, %s18
          %p257 = scmp.lt.s32.totalorder %s256, 31
          %s258 = scalar_select %p257, %s256, 31
          %s259 = smul.addr %s258, 8
          %s260 = scalar_lea.vmem %s0, %s259
          %s261 = smul.u32 16, %s18
        $region44: #{tpu_custom_call.1} parent=39 // pred_fallthru
          _
      $region40: #{tpu_custom_call.1} parent=5 // pred_fallthru
        _
      %p262 = scmp.le.s32.totalorder 1, %s18
      %p263 = scmp.lt.s32.totalorder %s18, 3
      %p264 = pnand %p262, %p263
      %p265 = pneg %p264
      // Predicated region
      $region45: #{tpu_custom_call.1} parent=5 // pred_check
        _
      $region46: #{tpu_custom_call.1} parent=5 // pred_check_branch
        %267 = sbr.rel (%p264) target = $region48
      $region47: #{tpu_custom_call.1} parent=5 // pred_region
        %s268 = ssub.s32 %s18, 1
        // Predicated region
        $region49: #{tpu_custom_call.1} parent=47 // pred_check
          %p269 = pneg %p107
        $region50: #{tpu_custom_call.1} parent=47 // pred_check_branch
          %271 = sbr.rel (%p269) target = $region52
        $region51: #{tpu_custom_call.1} parent=47 // pred_region
          %273 = dma.done [#allocation3], 8192
        $region52: #{tpu_custom_call.1} parent=47 // pred_fallthru
          _
        // Predicated region
        $region53: #{tpu_custom_call.1} parent=47 // pred_check
          %p274 = pneg %p170
        $region54: #{tpu_custom_call.1} parent=47 // pred_check_branch
          %276 = sbr.rel (%p274) target = $region56
        $region55: #{tpu_custom_call.1} parent=47 // pred_region
          %278 = dma.done [#allocation6], 16
        $region56: #{tpu_custom_call.1} parent=47 // pred_fallthru
          _
        %s279 = smul.u32 16, %s23
        %p280 = scmp.lt.s32.totalorder %s279, 31
        %s281 = scalar_select %p280, %s279, 31
        %s282 = smul.addr %s281, 8
        %s283 = scalar_lea.vmem %s0, %s282
        %p284 = pneg %p44
        %p285 = pneg %p41
        %p286 = pneg %p65
        %p287 = pneg %p62
        %p288 = pneg %p86
        %p289 = pneg %p83
        %p290 = pneg %p107
        %p291 = pneg %p104
        %p292 = pneg %p128
        %p293 = pneg %p125
        %p294 = pneg %p149
        %p295 = pneg %p146
        %p296 = pneg %p170
        %p297 = pneg %p167
        %p298 = pneg %p196
        %p299 = pneg %p193
        %s300 = sand.u32 %s183, 1
        %s301 = scalar_lea.sflag [#allocation4], %s300
        %s302 = sand.u32 %s183, 1
        %s303 = smul.addr %s302, 128
        %s304 = scalar_lea.vmem [#allocation7], %s303
        %s305 = smul.u32 16, %s23
        %p306 = scmp.lt.s32.totalorder %s305, 31
        %s307 = scalar_select %p306, %s305, 31
        %s308 = smul.addr %s307, 8
        %s309 = scalar_lea.vmem %s0, %s308
        %s310 = smul.u32 16, %s23
        %s311 = smul.u32 16, %s23
        %v312 = vld [vmem:[%s309] sm:$0xff]
        %v313 = vld [vmem:[%s309 + $0x8] sm:$0xff]
        %v314 = vld [vmem:[%s309 + $0x10] sm:$0xff]
        %v315 = vld [vmem:[%s309 + $0x18] sm:$0xff]
        %v316 = vld [vmem:[%s309 + $0x20] sm:$0xff]
        %v317 = vld [vmem:[%s309 + $0x28] sm:$0xff]
        %v318 = vld [vmem:[%s309 + $0x30] sm:$0xff]
        %v319 = vld [vmem:[%s309 + $0x38] sm:$0xff]
        %v320 = vld [vmem:[%s309 + $0x40] sm:$0xff]
        %v321 = vld [vmem:[%s309 + $0x48] sm:$0xff]
        %v322 = vld [vmem:[%s309 + $0x50] sm:$0xff]
        %v323 = vld [vmem:[%s309 + $0x58] sm:$0xff]
        %v324 = vld [vmem:[%s309 + $0x60] sm:$0xff]
        %v325 = vld [vmem:[%s309 + $0x68] sm:$0xff]
        %v326 = vld [vmem:[%s309 + $0x70] sm:$0xff]
        %v327 = vld [vmem:[%s309 + $0x78] sm:$0xff]
        %v328 = vld [vmem:[%s1] sm:$0xff]
        %v329 = vld [vmem:[%s1 + $0x8] sm:$0xff]
        %v330 = vld [vmem:[%s1 + $0x10] sm:$0xff]
        %v331 = vld [vmem:[%s1 + $0x18] sm:$0xff]
        %v332 = vld [vmem:[%s1 + $0x20] sm:$0xff]
        %v333 = vld [vmem:[%s1 + $0x28] sm:$0xff]
        %v334 = vld [vmem:[%s1 + $0x30] sm:$0xff]
        %v335 = vld [vmem:[%s1 + $0x38] sm:$0xff]
        %v336 = vld [vmem:[%s2] sm:$0x3]
        %v338 = vperm.slane %v336, 0
        %v339 = vperm.slane %v336, 1
        %vm342 = vcmask 261120
        %v344 = vsel %vm342, %v312, 0
        %v347 = vsel %vm342, %v313, 0
        %v350 = vsel %vm342, %v314, 0
        %v353 = vsel %vm342, %v315, 0
        %v356 = vsel %vm342, %v316, 0
        %v359 = vsel %vm342, %v317, 0
        %v362 = vsel %vm342, %v318, 0
        %v365 = vsel %vm342, %v319, 0
        %v368 = vsel %vm342, %v320, 0
        %v371 = vsel %vm342, %v321, 0
        %v374 = vsel %vm342, %v322, 0
        %v377 = vsel %vm342, %v323, 0
        %v380 = vsel %vm342, %v324, 0
        %v383 = vsel %vm342, %v325, 0
        %v386 = vsel %vm342, %v326, 0
        %v389 = vsel %vm342, %v327, 0
        %391 = vmatpush.msra.mxu0 0.0
        %392 = vmatpush.msra.mxu0 0.0
        %393 = vmatpush.msra.mxu0 0.0
        %394 = vmatpush.msra.mxu0 0.0
        %395 = vmatpush.msra.mxu0 0.0
        %396 = vmatpush.msra.mxu0 0.0
        %397 = vmatpush.msra.mxu0 0.0
        %398 = vmatpush.msra.mxu0 0.0
        %399 = vmatpush.msra.mxu0 0.0
        %400 = vmatpush.msra.mxu0 0.0
        %401 = vmatpush.msra.mxu0 0.0
        %402 = vmatpush.msra.mxu0 0.0
        %403 = vmatpush.msra.mxu0 %v334
        %404 = vmatpush.msra.mxu0 %v332
        %405 = vmatpush.msra.mxu0 %v330
        %406 = vmatpush.msra.mxu0 %v328
        %407 = vmatmul.f32.gmra.mxu0 %v344
        %v408 = vpop.f32.mrf.mxu0
        %v409 = vadd.f32 %v338, %v408
        %410 = vmatmul.f32.gmra.mxu0 %v347
        %v411 = vpop.f32.mrf.mxu0
        %v412 = vadd.f32 %v338, %v411
        %413 = vmatmul.f32.gmra.mxu0 %v350
        %v414 = vpop.f32.mrf.mxu0
        %v415 = vadd.f32 %v338, %v414
        %416 = vmatmul.f32.gmra.mxu0 %v353
        %v417 = vpop.f32.mrf.mxu0
        %v418 = vadd.f32 %v338, %v417
        %419 = vmatmul.f32.gmra.mxu0 %v356
        %v420 = vpop.f32.mrf.mxu0
        %v421 = vadd.f32 %v338, %v420
        %422 = vmatmul.f32.gmra.mxu0 %v359
        %v423 = vpop.f32.mrf.mxu0
        %v424 = vadd.f32 %v338, %v423
        %425 = vmatmul.f32.gmra.mxu0 %v362
        %v426 = vpop.f32.mrf.mxu0
        %v427 = vadd.f32 %v338, %v426
        %428 = vmatmul.f32.gmra.mxu0 %v365
        %v429 = vpop.f32.mrf.mxu0
        %v430 = vadd.f32 %v338, %v429
        %431 = vmatmul.f32.gmra.mxu0 %v368
        %v432 = vpop.f32.mrf.mxu0
        %v433 = vadd.f32 %v338, %v432
        %434 = vmatmul.f32.gmra.mxu0 %v371
        %v435 = vpop.f32.mrf.mxu0
        %v436 = vadd.f32 %v338, %v435
        %437 = vmatmul.f32.gmra.mxu0 %v374
        %v438 = vpop.f32.mrf.mxu0
        %v439 = vadd.f32 %v338, %v438
        %440 = vmatmul.f32.gmra.mxu0 %v377
        %v441 = vpop.f32.mrf.mxu0
        %v442 = vadd.f32 %v338, %v441
        %443 = vmatmul.f32.gmra.mxu0 %v380
        %v444 = vpop.f32.mrf.mxu0
        %v445 = vadd.f32 %v338, %v444
        %446 = vmatmul.f32.gmra.mxu0 %v383
        %v447 = vpop.f32.mrf.mxu0
        %v448 = vadd.f32 %v338, %v447
        %449 = vmatmul.f32.gmra.mxu0 %v386
        %v450 = vpop.f32.mrf.mxu0
        %v451 = vadd.f32 %v338, %v450
        %452 = vmatmul.f32.gmra.mxu0 %v389
        %v453 = vpop.f32.mrf.mxu0
        %v454 = vadd.f32 %v338, %v453
        %455 = vdwg.mxu0
        %456 = vmatpush.msra.mxu0 0.0
        %457 = vmatpush.msra.mxu0 0.0
        %458 = vmatpush.msra.mxu0 0.0
        %459 = vmatpush.msra.mxu0 0.0
        %460 = vmatpush.msra.mxu0 0.0
        %461 = vmatpush.msra.mxu0 0.0
        %462 = vmatpush.msra.mxu0 0.0
        %463 = vmatpush.msra.mxu0 0.0
        %464 = vmatpush.msra.mxu0 0.0
        %465 = vmatpush.msra.mxu0 0.0
        %466 = vmatpush.msra.mxu0 0.0
        %467 = vmatpush.msra.mxu0 0.0
        %468 = vmatpush.msra.mxu0 %v335
        %469 = vmatpush.msra.mxu0 %v333
        %470 = vmatpush.msra.mxu0 %v331
        %471 = vmatpush.msra.mxu0 %v329
        %472 = vmatmul.f32.gmra.mxu0 %v344
        %v473 = vpop.f32.mrf.mxu0
        %v474 = vadd.f32 %v339, %v473
        %475 = vmatmul.f32.gmra.mxu0 %v347
        %v476 = vpop.f32.mrf.mxu0
        %v477 = vadd.f32 %v339, %v476
        %478 = vmatmul.f32.gmra.mxu0 %v350
        %v479 = vpop.f32.mrf.mxu0
        %v480 = vadd.f32 %v339, %v479
        %481 = vmatmul.f32.gmra.mxu0 %v353
        %v482 = vpop.f32.mrf.mxu0
        %v483 = vadd.f32 %v339, %v482
        %484 = vmatmul.f32.gmra.mxu0 %v356
        %v485 = vpop.f32.mrf.mxu0
        %v486 = vadd.f32 %v339, %v485
        %487 = vmatmul.f32.gmra.mxu0 %v359
        %v488 = vpop.f32.mrf.mxu0
        %v489 = vadd.f32 %v339, %v488
        %490 = vmatmul.f32.gmra.mxu0 %v362
        %v491 = vpop.f32.mrf.mxu0
        %v492 = vadd.f32 %v339, %v491
        %493 = vmatmul.f32.gmra.mxu0 %v365
        %v494 = vpop.f32.mrf.mxu0
        %v495 = vadd.f32 %v339, %v494
        %496 = vmatmul.f32.gmra.mxu0 %v368
        %v497 = vpop.f32.mrf.mxu0
        %v498 = vadd.f32 %v339, %v497
        %499 = vmatmul.f32.gmra.mxu0 %v371
        %v500 = vpop.f32.mrf.mxu0
        %v501 = vadd.f32 %v339, %v500
        %502 = vmatmul.f32.gmra.mxu0 %v374
        %v503 = vpop.f32.mrf.mxu0
        %v504 = vadd.f32 %v339, %v503
        %505 = vmatmul.f32.gmra.mxu0 %v377
        %v506 = vpop.f32.mrf.mxu0
        %v507 = vadd.f32 %v339, %v506
        %508 = vmatmul.f32.gmra.mxu0 %v380
        %v509 = vpop.f32.mrf.mxu0
        %v510 = vadd.f32 %v339, %v509
        %511 = vmatmul.f32.gmra.mxu0 %v383
        %v512 = vpop.f32.mrf.mxu0
        %v513 = vadd.f32 %v339, %v512
        %514 = vmatmul.f32.gmra.mxu0 %v386
        %v515 = vpop.f32.mrf.mxu0
        %v516 = vadd.f32 %v339, %v515
        %517 = vmatmul.f32.gmra.mxu0 %v389
        %v518 = vpop.f32.mrf.mxu0
        %v519 = vadd.f32 %v339, %v518
        %520 = vdwg.mxu0
        %v521 = vmax.f32 %v409, 0.0
        %v522 = vmax.f32 %v474, 0.0
        %v523 = vmax.f32 %v412, 0.0
        %v524 = vmax.f32 %v477, 0.0
        %v525 = vmax.f32 %v415, 0.0
        %v526 = vmax.f32 %v480, 0.0
        %v527 = vmax.f32 %v418, 0.0
        %v528 = vmax.f32 %v483, 0.0
        %v529 = vmax.f32 %v421, 0.0
        %v530 = vmax.f32 %v486, 0.0
        %v531 = vmax.f32 %v424, 0.0
        %v532 = vmax.f32 %v489, 0.0
        %v533 = vmax.f32 %v427, 0.0
        %v534 = vmax.f32 %v492, 0.0
        %v535 = vmax.f32 %v430, 0.0
        %v536 = vmax.f32 %v495, 0.0
        %v537 = vmax.f32 %v433, 0.0
        %v538 = vmax.f32 %v498, 0.0
        %v539 = vmax.f32 %v436, 0.0
        %v540 = vmax.f32 %v501, 0.0
        %v541 = vmax.f32 %v439, 0.0
        %v542 = vmax.f32 %v504, 0.0
        %v543 = vmax.f32 %v442, 0.0
        %v544 = vmax.f32 %v507, 0.0
        %v545 = vmax.f32 %v445, 0.0
        %v546 = vmax.f32 %v510, 0.0
        %v547 = vmax.f32 %v448, 0.0
        %v548 = vmax.f32 %v513, 0.0
        %v549 = vmax.f32 %v451, 0.0
        %v550 = vmax.f32 %v516, 0.0
        %v551 = vmax.f32 %v454, 0.0
        %v552 = vmax.f32 %v519, 0.0
        %v553 = vld [vmem:[#allocation2] sm:$0xff]
        %v554 = vld [vmem:[#allocation2 + $0x8] sm:$0xff]
        %v555 = vld [vmem:[#allocation2 + $0x10] sm:$0xff]
        %v556 = vld [vmem:[#allocation2 + $0x18] sm:$0xff]
        %v557 = vld [vmem:[#allocation2 + $0x20] sm:$0xff]
        %v558 = vld [vmem:[#allocation2 + $0x28] sm:$0xff]
        %v559 = vld [vmem:[#allocation2 + $0x30] sm:$0xff]
        %v560 = vld [vmem:[#allocation2 + $0x38] sm:$0xff]
        %v561 = vld [vmem:[#allocation2 + $0x40] sm:$0xff]
        %v562 = vld [vmem:[#allocation2 + $0x48] sm:$0xff]
        %v563 = vld [vmem:[#allocation2 + $0x50] sm:$0xff]
        %v564 = vld [vmem:[#allocation2 + $0x58] sm:$0xff]
        %v565 = vld [vmem:[#allocation2 + $0x60] sm:$0xff]
        %v566 = vld [vmem:[#allocation2 + $0x68] sm:$0xff]
        %v567 = vld [vmem:[#allocation2 + $0x70] sm:$0xff]
        %v568 = vld [vmem:[#allocation2 + $0x78] sm:$0xff]
        %v569 = vld [vmem:[#allocation2 + $0x80] sm:$0xff]
        %v570 = vld [vmem:[#allocation2 + $0x88] sm:$0xff]
        %v571 = vld [vmem:[#allocation2 + $0x90] sm:$0xff]
        %v572 = vld [vmem:[#allocation2 + $0x98] sm:$0xff]
        %v573 = vld [vmem:[#allocation2 + $0xa0] sm:$0xff]
        %v574 = vld [vmem:[#allocation2 + $0xa8] sm:$0xff]
        %v575 = vld [vmem:[#allocation2 + $0xb0] sm:$0xff]
        %v576 = vld [vmem:[#allocation2 + $0xb8] sm:$0xff]
        %v577 = vld [vmem:[#allocation2 + $0xc0] sm:$0xff]
        %v578 = vld [vmem:[#allocation2 + $0xc8] sm:$0xff]
        %v579 = vld [vmem:[#allocation2 + $0xd0] sm:$0xff]
        %v580 = vld [vmem:[#allocation2 + $0xd8] sm:$0xff]
        %v581 = vld [vmem:[#allocation2 + $0xe0] sm:$0xff]
        %v582 = vld [vmem:[#allocation2 + $0xe8] sm:$0xff]
        %v583 = vld [vmem:[#allocation2 + $0xf0] sm:$0xff]
        %v584 = vld [vmem:[#allocation2 + $0xf8] sm:$0xff]
        %v585 = vld [vmem:[#allocation2 + $0x100] sm:$0xff]
        %v586 = vld [vmem:[#allocation2 + $0x108] sm:$0xff]
        %v587 = vld [vmem:[#allocation2 + $0x110] sm:$0xff]
        %v588 = vld [vmem:[#allocation2 + $0x118] sm:$0xff]
        %v589 = vld [vmem:[#allocation2 + $0x120] sm:$0xff]
        %v590 = vld [vmem:[#allocation2 + $0x128] sm:$0xff]
        %v591 = vld [vmem:[#allocation2 + $0x130] sm:$0xff]
        %v592 = vld [vmem:[#allocation2 + $0x138] sm:$0xff]
        %v593 = vld [vmem:[#allocation2 + $0x140] sm:$0xff]
        %v594 = vld [vmem:[#allocation2 + $0x148] sm:$0xff]
        %v595 = vld [vmem:[#allocation2 + $0x150] sm:$0xff]
        %v596 = vld [vmem:[#allocation2 + $0x158] sm:$0xff]
        %v597 = vld [vmem:[#allocation2 + $0x160] sm:$0xff]
        %v598 = vld [vmem:[#allocation2 + $0x168] sm:$0xff]
        %v599 = vld [vmem:[#allocation2 + $0x170] sm:$0xff]
        %v600 = vld [vmem:[#allocation2 + $0x178] sm:$0xff]
        %v601 = vld [vmem:[#allocation2 + $0x180] sm:$0xff]
        %v602 = vld [vmem:[#allocation2 + $0x188] sm:$0xff]
        %v603 = vld [vmem:[#allocation2 + $0x190] sm:$0xff]
        %v604 = vld [vmem:[#allocation2 + $0x198] sm:$0xff]
        %v605 = vld [vmem:[#allocation2 + $0x1a0] sm:$0xff]
        %v606 = vld [vmem:[#allocation2 + $0x1a8] sm:$0xff]
        %v607 = vld [vmem:[#allocation2 + $0x1b0] sm:$0xff]
        %v608 = vld [vmem:[#allocation2 + $0x1b8] sm:$0xff]
        %v609 = vld [vmem:[#allocation2 + $0x1c0] sm:$0xff]
        %v610 = vld [vmem:[#allocation2 + $0x1c8] sm:$0xff]
        %v611 = vld [vmem:[#allocation2 + $0x1d0] sm:$0xff]
        %v612 = vld [vmem:[#allocation2 + $0x1d8] sm:$0xff]
        %v613 = vld [vmem:[#allocation2 + $0x1e0] sm:$0xff]
        %v614 = vld [vmem:[#allocation2 + $0x1e8] sm:$0xff]
        %v615 = vld [vmem:[#allocation2 + $0x1f0] sm:$0xff]
        %v616 = vld [vmem:[#allocation2 + $0x1f8] sm:$0xff]
        %v617 = vld [vmem:[%s4] sm:$0x3]
        %v619 = vperm.slane %v617, 0
        %v620 = vperm.slane %v617, 1
        %623 = vmatpush.msra.mxu0 %v583
        %624 = vmatpush.msra.mxu0 %v581
        %625 = vmatpush.msra.mxu0 %v579
        %626 = vmatpush.msra.mxu0 %v577
        %627 = vmatpush.msra.mxu0 %v575
        %628 = vmatpush.msra.mxu0 %v573
        %629 = vmatpush.msra.mxu0 %v571
        %630 = vmatpush.msra.mxu0 %v569
        %631 = vmatpush.msra.mxu0 %v567
        %632 = vmatpush.msra.mxu0 %v565
        %633 = vmatpush.msra.mxu0 %v563
        %634 = vmatpush.msra.mxu0 %v561
        %635 = vmatpush.msra.mxu0 %v559
        %636 = vmatpush.msra.mxu0 %v557
        %637 = vmatpush.msra.mxu0 %v555
        %638 = vmatpush.msra.mxu0 %v553
        %639 = vmatmul.f32.gmra.mxu0 %v521
        %v640 = vpop.f32.mrf.mxu0
        %v641 = vadd.f32 %v619, %v640
        %642 = vmatmul.f32.gmra.mxu0 %v523
        %v643 = vpop.f32.mrf.mxu0
        %v644 = vadd.f32 %v619, %v643
        %645 = vmatmul.f32.gmra.mxu0 %v525
        %v646 = vpop.f32.mrf.mxu0
        %v647 = vadd.f32 %v619, %v646
        %648 = vmatmul.f32.gmra.mxu0 %v527
        %v649 = vpop.f32.mrf.mxu0
        %v650 = vadd.f32 %v619, %v649
        %651 = vmatmul.f32.gmra.mxu0 %v529
        %v652 = vpop.f32.mrf.mxu0
        %v653 = vadd.f32 %v619, %v652
        %654 = vmatmul.f32.gmra.mxu0 %v531
        %v655 = vpop.f32.mrf.mxu0
        %v656 = vadd.f32 %v619, %v655
        %657 = vmatmul.f32.gmra.mxu0 %v533
        %v658 = vpop.f32.mrf.mxu0
        %v659 = vadd.f32 %v619, %v658
        %660 = vmatmul.f32.gmra.mxu0 %v535
        %v661 = vpop.f32.mrf.mxu0
        %v662 = vadd.f32 %v619, %v661
        %663 = vmatmul.f32.gmra.mxu0 %v537
        %v664 = vpop.f32.mrf.mxu0
        %v665 = vadd.f32 %v619, %v664
        %666 = vmatmul.f32.gmra.mxu0 %v539
        %v667 = vpop.f32.mrf.mxu0
        %v668 = vadd.f32 %v619, %v667
        %669 = vmatmul.f32.gmra.mxu0 %v541
        %v670 = vpop.f32.mrf.mxu0
        %v671 = vadd.f32 %v619, %v670
        %672 = vmatmul.f32.gmra.mxu0 %v543
        %v673 = vpop.f32.mrf.mxu0
        %v674 = vadd.f32 %v619, %v673
        %675 = vmatmul.f32.gmra.mxu0 %v545
        %v676 = vpop.f32.mrf.mxu0
        %v677 = vadd.f32 %v619, %v676
        %678 = vmatmul.f32.gmra.mxu0 %v547
        %v679 = vpop.f32.mrf.mxu0
        %v680 = vadd.f32 %v619, %v679
        %681 = vmatmul.f32.gmra.mxu0 %v549
        %v682 = vpop.f32.mrf.mxu0
        %v683 = vadd.f32 %v619, %v682
        %684 = vmatmul.f32.gmra.mxu0 %v551
        %v685 = vpop.f32.mrf.mxu0
        %v686 = vadd.f32 %v619, %v685
        %687 = vdwg.mxu0
        %688 = vmatpush.msra.mxu0 %v615
        %689 = vmatpush.msra.mxu0 %v613
        %690 = vmatpush.msra.mxu0 %v611
        %691 = vmatpush.msra.mxu0 %v609
        %692 = vmatpush.msra.mxu0 %v607
        %693 = vmatpush.msra.mxu0 %v605
        %694 = vmatpush.msra.mxu0 %v603
        %695 = vmatpush.msra.mxu0 %v601
        %696 = vmatpush.msra.mxu0 %v599
        %697 = vmatpush.msra.mxu0 %v597
        %698 = vmatpush.msra.mxu0 %v595
        %699 = vmatpush.msra.mxu0 %v593
        %700 = vmatpush.msra.mxu0 %v591
        %701 = vmatpush.msra.mxu0 %v589
        %702 = vmatpush.msra.mxu0 %v587
        %703 = vmatpush.msra.mxu0 %v585
        %704 = vmatmul.f32.gmra.mxu0 %v522
        %v705 = vpop.f32.mrf.mxu0
        %v706 = vadd.f32 %v641, %v705
        %707 = vmatmul.f32.gmra.mxu0 %v524
        %v708 = vpop.f32.mrf.mxu0
        %v709 = vadd.f32 %v644, %v708
        %710 = vmatmul.f32.gmra.mxu0 %v526
        %v711 = vpop.f32.mrf.mxu0
        %v712 = vadd.f32 %v647, %v711
        %713 = vmatmul.f32.gmra.mxu0 %v528
        %v714 = vpop.f32.mrf.mxu0
        %v715 = vadd.f32 %v650, %v714
        %716 = vmatmul.f32.gmra.mxu0 %v530
        %v717 = vpop.f32.mrf.mxu0
        %v718 = vadd.f32 %v653, %v717
        %719 = vmatmul.f32.gmra.mxu0 %v532
        %v720 = vpop.f32.mrf.mxu0
        %v721 = vadd.f32 %v656, %v720
        %722 = vmatmul.f32.gmra.mxu0 %v534
        %v723 = vpop.f32.mrf.mxu0
        %v724 = vadd.f32 %v659, %v723
        %725 = vmatmul.f32.gmra.mxu0 %v536
        %v726 = vpop.f32.mrf.mxu0
        %v727 = vadd.f32 %v662, %v726
        %728 = vmatmul.f32.gmra.mxu0 %v538
        %v729 = vpop.f32.mrf.mxu0
        %v730 = vadd.f32 %v665, %v729
        %731 = vmatmul.f32.gmra.mxu0 %v540
        %v732 = vpop.f32.mrf.mxu0
        %v733 = vadd.f32 %v668, %v732
        %734 = vmatmul.f32.gmra.mxu0 %v542
        %v735 = vpop.f32.mrf.mxu0
        %v736 = vadd.f32 %v671, %v735
        %737 = vmatmul.f32.gmra.mxu0 %v544
        %v738 = vpop.f32.mrf.mxu0
        %v739 = vadd.f32 %v674, %v738
        %740 = vmatmul.f32.gmra.mxu0 %v546
        %v741 = vpop.f32.mrf.mxu0
        %v742 = vadd.f32 %v677, %v741
        %743 = vmatmul.f32.gmra.mxu0 %v548
        %v744 = vpop.f32.mrf.mxu0
        %v745 = vadd.f32 %v680, %v744
        %746 = vmatmul.f32.gmra.mxu0 %v550
        %v747 = vpop.f32.mrf.mxu0
        %v748 = vadd.f32 %v683, %v747
        %749 = vmatmul.f32.gmra.mxu0 %v552
        %v750 = vpop.f32.mrf.mxu0
        %v751 = vadd.f32 %v686, %v750
        %752 = vdwg.mxu0
        %753 = vmatpush.msra.mxu0 %v584
        %754 = vmatpush.msra.mxu0 %v582
        %755 = vmatpush.msra.mxu0 %v580
        %756 = vmatpush.msra.mxu0 %v578
        %757 = vmatpush.msra.mxu0 %v576
        %758 = vmatpush.msra.mxu0 %v574
        %759 = vmatpush.msra.mxu0 %v572
        %760 = vmatpush.msra.mxu0 %v570
        %761 = vmatpush.msra.mxu0 %v568
        %762 = vmatpush.msra.mxu0 %v566
        %763 = vmatpush.msra.mxu0 %v564
        %764 = vmatpush.msra.mxu0 %v562
        %765 = vmatpush.msra.mxu0 %v560
        %766 = vmatpush.msra.mxu0 %v558
        %767 = vmatpush.msra.mxu0 %v556
        %768 = vmatpush.msra.mxu0 %v554
        %769 = vmatmul.f32.gmra.mxu0 %v521
        %v770 = vpop.f32.mrf.mxu0
        %v771 = vadd.f32 %v620, %v770
        %772 = vmatmul.f32.gmra.mxu0 %v523
        %v773 = vpop.f32.mrf.mxu0
        %v774 = vadd.f32 %v620, %v773
        %775 = vmatmul.f32.gmra.mxu0 %v525
        %v776 = vpop.f32.mrf.mxu0
        %v777 = vadd.f32 %v620, %v776
        %778 = vmatmul.f32.gmra.mxu0 %v527
        %v779 = vpop.f32.mrf.mxu0
        %v780 = vadd.f32 %v620, %v779
        %781 = vmatmul.f32.gmra.mxu0 %v529
        %v782 = vpop.f32.mrf.mxu0
        %v783 = vadd.f32 %v620, %v782
        %784 = vmatmul.f32.gmra.mxu0 %v531
        %v785 = vpop.f32.mrf.mxu0
        %v786 = vadd.f32 %v620, %v785
        %787 = vmatmul.f32.gmra.mxu0 %v533
        %v788 = vpop.f32.mrf.mxu0
        %v789 = vadd.f32 %v620, %v788
        %790 = vmatmul.f32.gmra.mxu0 %v535
        %v791 = vpop.f32.mrf.mxu0
        %v792 = vadd.f32 %v620, %v791
        %793 = vmatmul.f32.gmra.mxu0 %v537
        %v794 = vpop.f32.mrf.mxu0
        %v795 = vadd.f32 %v620, %v794
        %796 = vmatmul.f32.gmra.mxu0 %v539
        %v797 = vpop.f32.mrf.mxu0
        %v798 = vadd.f32 %v620, %v797
        %799 = vmatmul.f32.gmra.mxu0 %v541
        %v800 = vpop.f32.mrf.mxu0
        %v801 = vadd.f32 %v620, %v800
        %802 = vmatmul.f32.gmra.mxu0 %v543
        %v803 = vpop.f32.mrf.mxu0
        %v804 = vadd.f32 %v620, %v803
        %805 = vmatmul.f32.gmra.mxu0 %v545
        %v806 = vpop.f32.mrf.mxu0
        %v807 = vadd.f32 %v620, %v806
        %808 = vmatmul.f32.gmra.mxu0 %v547
        %v809 = vpop.f32.mrf.mxu0
        %v810 = vadd.f32 %v620, %v809
        %811 = vmatmul.f32.gmra.mxu0 %v549
        %v812 = vpop.f32.mrf.mxu0
        %v813 = vadd.f32 %v620, %v812
        %814 = vmatmul.f32.gmra.mxu0 %v551
        %v815 = vpop.f32.mrf.mxu0
        %v816 = vadd.f32 %v620, %v815
        %817 = vdwg.mxu0
        %818 = vmatpush.msra.mxu0 %v616
        %819 = vmatpush.msra.mxu0 %v614
        %820 = vmatpush.msra.mxu0 %v612
        %821 = vmatpush.msra.mxu0 %v610
        %822 = vmatpush.msra.mxu0 %v608
        %823 = vmatpush.msra.mxu0 %v606
        %824 = vmatpush.msra.mxu0 %v604
        %825 = vmatpush.msra.mxu0 %v602
        %826 = vmatpush.msra.mxu0 %v600
        %827 = vmatpush.msra.mxu0 %v598
        %828 = vmatpush.msra.mxu0 %v596
        %829 = vmatpush.msra.mxu0 %v594
        %830 = vmatpush.msra.mxu0 %v592
        %831 = vmatpush.msra.mxu0 %v590
        %832 = vmatpush.msra.mxu0 %v588
        %833 = vmatpush.msra.mxu0 %v586
        %834 = vmatmul.f32.gmra.mxu0 %v522
        %v835 = vpop.f32.mrf.mxu0
        %v836 = vadd.f32 %v771, %v835
        %837 = vmatmul.f32.gmra.mxu0 %v524
        %v838 = vpop.f32.mrf.mxu0
        %v839 = vadd.f32 %v774, %v838
        %840 = vmatmul.f32.gmra.mxu0 %v526
        %v841 = vpop.f32.mrf.mxu0
        %v842 = vadd.f32 %v777, %v841
        %843 = vmatmul.f32.gmra.mxu0 %v528
        %v844 = vpop.f32.mrf.mxu0
        %v845 = vadd.f32 %v780, %v844
        %846 = vmatmul.f32.gmra.mxu0 %v530
        %v847 = vpop.f32.mrf.mxu0
        %v848 = vadd.f32 %v783, %v847
        %849 = vmatmul.f32.gmra.mxu0 %v532
        %v850 = vpop.f32.mrf.mxu0
        %v851 = vadd.f32 %v786, %v850
        %852 = vmatmul.f32.gmra.mxu0 %v534
        %v853 = vpop.f32.mrf.mxu0
        %v854 = vadd.f32 %v789, %v853
        %855 = vmatmul.f32.gmra.mxu0 %v536
        %v856 = vpop.f32.mrf.mxu0
        %v857 = vadd.f32 %v792, %v856
        %858 = vmatmul.f32.gmra.mxu0 %v538
        %v859 = vpop.f32.mrf.mxu0
        %v860 = vadd.f32 %v795, %v859
        %861 = vmatmul.f32.gmra.mxu0 %v540
        %v862 = vpop.f32.mrf.mxu0
        %v863 = vadd.f32 %v798, %v862
        %864 = vmatmul.f32.gmra.mxu0 %v542
        %v865 = vpop.f32.mrf.mxu0
        %v866 = vadd.f32 %v801, %v865
        %867 = vmatmul.f32.gmra.mxu0 %v544
        %v868 = vpop.f32.mrf.mxu0
        %v869 = vadd.f32 %v804, %v868
        %870 = vmatmul.f32.gmra.mxu0 %v546
        %v871 = vpop.f32.mrf.mxu0
        %v872 = vadd.f32 %v807, %v871
        %873 = vmatmul.f32.gmra.mxu0 %v548
        %v874 = vpop.f32.mrf.mxu0
        %v875 = vadd.f32 %v810, %v874
        %876 = vmatmul.f32.gmra.mxu0 %v550
        %v877 = vpop.f32.mrf.mxu0
        %v878 = vadd.f32 %v813, %v877
        %879 = vmatmul.f32.gmra.mxu0 %v552
        %v880 = vpop.f32.mrf.mxu0
        %v881 = vadd.f32 %v816, %v880
        %882 = vdwg.mxu0
        %v883 = vmax.f32 %v706, 0.0
        %v884 = vmax.f32 %v836, 0.0
        %v885 = vmax.f32 %v709, 0.0
        %v886 = vmax.f32 %v839, 0.0
        %v887 = vmax.f32 %v712, 0.0
        %v888 = vmax.f32 %v842, 0.0
        %v889 = vmax.f32 %v715, 0.0
        %v890 = vmax.f32 %v845, 0.0
        %v891 = vmax.f32 %v718, 0.0
        %v892 = vmax.f32 %v848, 0.0
        %v893 = vmax.f32 %v721, 0.0
        %v894 = vmax.f32 %v851, 0.0
        %v895 = vmax.f32 %v724, 0.0
        %v896 = vmax.f32 %v854, 0.0
        %v897 = vmax.f32 %v727, 0.0
        %v898 = vmax.f32 %v857, 0.0
        %v899 = vmax.f32 %v730, 0.0
        %v900 = vmax.f32 %v860, 0.0
        %v901 = vmax.f32 %v733, 0.0
        %v902 = vmax.f32 %v863, 0.0
        %v903 = vmax.f32 %v736, 0.0
        %v904 = vmax.f32 %v866, 0.0
        %v905 = vmax.f32 %v739, 0.0
        %v906 = vmax.f32 %v869, 0.0
        %v907 = vmax.f32 %v742, 0.0
        %v908 = vmax.f32 %v872, 0.0
        %v909 = vmax.f32 %v745, 0.0
        %v910 = vmax.f32 %v875, 0.0
        %v911 = vmax.f32 %v748, 0.0
        %v912 = vmax.f32 %v878, 0.0
        %v913 = vmax.f32 %v751, 0.0
        %v914 = vmax.f32 %v881, 0.0
        %v915 = vld [vmem:[%s5] sm:$0xff]
        %v916 = vld [vmem:[%s5 + $0x8] sm:$0xff]
        %v917 = vld [vmem:[%s5 + $0x10] sm:$0xff]
        %v918 = vld [vmem:[%s5 + $0x18] sm:$0xff]
        %v919 = vld [vmem:[%s5 + $0x20] sm:$0xff]
        %v920 = vld [vmem:[%s5 + $0x28] sm:$0xff]
        %v921 = vld [vmem:[%s5 + $0x30] sm:$0xff]
        %v922 = vld [vmem:[%s5 + $0x38] sm:$0xff]
        %v923 = vld [vmem:[%s5 + $0x40] sm:$0xff]
        %v924 = vld [vmem:[%s5 + $0x48] sm:$0xff]
        %v925 = vld [vmem:[%s5 + $0x50] sm:$0xff]
        %v926 = vld [vmem:[%s5 + $0x58] sm:$0xff]
        %v927 = vld [vmem:[%s5 + $0x60] sm:$0xff]
        %v928 = vld [vmem:[%s5 + $0x68] sm:$0xff]
        %v929 = vld [vmem:[%s5 + $0x70] sm:$0xff]
        %v930 = vld [vmem:[%s5 + $0x78] sm:$0xff]
        %v931 = vld [vmem:[%s5 + $0x80] sm:$0xff]
        %v932 = vld [vmem:[%s5 + $0x88] sm:$0xff]
        %v933 = vld [vmem:[%s5 + $0x90] sm:$0xff]
        %v934 = vld [vmem:[%s5 + $0x98] sm:$0xff]
        %v935 = vld [vmem:[%s5 + $0xa0] sm:$0xff]
        %v936 = vld [vmem:[%s5 + $0xa8] sm:$0xff]
        %v937 = vld [vmem:[%s5 + $0xb0] sm:$0xff]
        %v938 = vld [vmem:[%s5 + $0xb8] sm:$0xff]
        %v939 = vld [vmem:[%s5 + $0xc0] sm:$0xff]
        %v940 = vld [vmem:[%s5 + $0xc8] sm:$0xff]
        %v941 = vld [vmem:[%s5 + $0xd0] sm:$0xff]
        %v942 = vld [vmem:[%s5 + $0xd8] sm:$0xff]
        %v943 = vld [vmem:[%s5 + $0xe0] sm:$0xff]
        %v944 = vld [vmem:[%s5 + $0xe8] sm:$0xff]
        %v945 = vld [vmem:[%s5 + $0xf0] sm:$0xff]
        %v946 = vld [vmem:[%s5 + $0xf8] sm:$0xff]
        %v947 = vld [vmem:[#allocation5] sm:$0x1]
        %v949 = vperm.slane %v947, 0
        %951 = vmatpush.msra.mxu0 %v930
        %952 = vmatpush.msra.mxu0 %v929
        %953 = vmatpush.msra.mxu0 %v928
        %954 = vmatpush.msra.mxu0 %v927
        %955 = vmatpush.msra.mxu0 %v926
        %956 = vmatpush.msra.mxu0 %v925
        %957 = vmatpush.msra.mxu0 %v924
        %958 = vmatpush.msra.mxu0 %v923
        %959 = vmatpush.msra.mxu0 %v922
        %960 = vmatpush.msra.mxu0 %v921
        %961 = vmatpush.msra.mxu0 %v920
        %962 = vmatpush.msra.mxu0 %v919
        %963 = vmatpush.msra.mxu0 %v918
        %964 = vmatpush.msra.mxu0 %v917
        %965 = vmatpush.msra.mxu0 %v916
        %966 = vmatpush.msra.mxu0 %v915
        %967 = vmatmul.f32.gmra.mxu0 %v883
        %v968 = vpop.f32.mrf.mxu0
        %v969 = vadd.f32 %v949, %v968
        %970 = vmatmul.f32.gmra.mxu0 %v885
        %v971 = vpop.f32.mrf.mxu0
        %v972 = vadd.f32 %v949, %v971
        %973 = vmatmul.f32.gmra.mxu0 %v887
        %v974 = vpop.f32.mrf.mxu0
        %v975 = vadd.f32 %v949, %v974
        %976 = vmatmul.f32.gmra.mxu0 %v889
        %v977 = vpop.f32.mrf.mxu0
        %v978 = vadd.f32 %v949, %v977
        %979 = vmatmul.f32.gmra.mxu0 %v891
        %v980 = vpop.f32.mrf.mxu0
        %v981 = vadd.f32 %v949, %v980
        %982 = vmatmul.f32.gmra.mxu0 %v893
        %v983 = vpop.f32.mrf.mxu0
        %v984 = vadd.f32 %v949, %v983
        %985 = vmatmul.f32.gmra.mxu0 %v895
        %v986 = vpop.f32.mrf.mxu0
        %v987 = vadd.f32 %v949, %v986
        %988 = vmatmul.f32.gmra.mxu0 %v897
        %v989 = vpop.f32.mrf.mxu0
        %v990 = vadd.f32 %v949, %v989
        %991 = vmatmul.f32.gmra.mxu0 %v899
        %v992 = vpop.f32.mrf.mxu0
        %v993 = vadd.f32 %v949, %v992
        %994 = vmatmul.f32.gmra.mxu0 %v901
        %v995 = vpop.f32.mrf.mxu0
        %v996 = vadd.f32 %v949, %v995
        %997 = vmatmul.f32.gmra.mxu0 %v903
        %v998 = vpop.f32.mrf.mxu0
        %v999 = vadd.f32 %v949, %v998
        %1000 = vmatmul.f32.gmra.mxu0 %v905
        %v1001 = vpop.f32.mrf.mxu0
        %v1002 = vadd.f32 %v949, %v1001
        %1003 = vmatmul.f32.gmra.mxu0 %v907
        %v1004 = vpop.f32.mrf.mxu0
        %v1005 = vadd.f32 %v949, %v1004
        %1006 = vmatmul.f32.gmra.mxu0 %v909
        %v1007 = vpop.f32.mrf.mxu0
        %v1008 = vadd.f32 %v949, %v1007
        %1009 = vmatmul.f32.gmra.mxu0 %v911
        %v1010 = vpop.f32.mrf.mxu0
        %v1011 = vadd.f32 %v949, %v1010
        %1012 = vmatmul.f32.gmra.mxu0 %v913
        %v1013 = vpop.f32.mrf.mxu0
        %v1014 = vadd.f32 %v949, %v1013
        %1015 = vdwg.mxu0
        %1016 = vmatpush.msra.mxu0 %v946
        %1017 = vmatpush.msra.mxu0 %v945
        %1018 = vmatpush.msra.mxu0 %v944
        %1019 = vmatpush.msra.mxu0 %v943
        %1020 = vmatpush.msra.mxu0 %v942
        %1021 = vmatpush.msra.mxu0 %v941
        %1022 = vmatpush.msra.mxu0 %v940
        %1023 = vmatpush.msra.mxu0 %v939
        %1024 = vmatpush.msra.mxu0 %v938
        %1025 = vmatpush.msra.mxu0 %v937
        %1026 = vmatpush.msra.mxu0 %v936
        %1027 = vmatpush.msra.mxu0 %v935
        %1028 = vmatpush.msra.mxu0 %v934
        %1029 = vmatpush.msra.mxu0 %v933
        %1030 = vmatpush.msra.mxu0 %v932
        %1031 = vmatpush.msra.mxu0 %v931
        %1032 = vmatmul.f32.gmra.mxu0 %v884
        %v1033 = vpop.f32.mrf.mxu0
        %v1034 = vadd.f32 %v969, %v1033
        %1035 = vmatmul.f32.gmra.mxu0 %v886
        %v1036 = vpop.f32.mrf.mxu0
        %v1037 = vadd.f32 %v972, %v1036
        %1038 = vmatmul.f32.gmra.mxu0 %v888
        %v1039 = vpop.f32.mrf.mxu0
        %v1040 = vadd.f32 %v975, %v1039
        %1041 = vmatmul.f32.gmra.mxu0 %v890
        %v1042 = vpop.f32.mrf.mxu0
        %v1043 = vadd.f32 %v978, %v1042
        %1044 = vmatmul.f32.gmra.mxu0 %v892
        %v1045 = vpop.f32.mrf.mxu0
        %v1046 = vadd.f32 %v981, %v1045
        %1047 = vmatmul.f32.gmra.mxu0 %v894
        %v1048 = vpop.f32.mrf.mxu0
        %v1049 = vadd.f32 %v984, %v1048
        %1050 = vmatmul.f32.gmra.mxu0 %v896
        %v1051 = vpop.f32.mrf.mxu0
        %v1052 = vadd.f32 %v987, %v1051
        %1053 = vmatmul.f32.gmra.mxu0 %v898
        %v1054 = vpop.f32.mrf.mxu0
        %v1055 = vadd.f32 %v990, %v1054
        %1056 = vmatmul.f32.gmra.mxu0 %v900
        %v1057 = vpop.f32.mrf.mxu0
        %v1058 = vadd.f32 %v993, %v1057
        %1059 = vmatmul.f32.gmra.mxu0 %v902
        %v1060 = vpop.f32.mrf.mxu0
        %v1061 = vadd.f32 %v996, %v1060
        %1062 = vmatmul.f32.gmra.mxu0 %v904
        %v1063 = vpop.f32.mrf.mxu0
        %v1064 = vadd.f32 %v999, %v1063
        %1065 = vmatmul.f32.gmra.mxu0 %v906
        %v1066 = vpop.f32.mrf.mxu0
        %v1067 = vadd.f32 %v1002, %v1066
        %1068 = vmatmul.f32.gmra.mxu0 %v908
        %v1069 = vpop.f32.mrf.mxu0
        %v1070 = vadd.f32 %v1005, %v1069
        %1071 = vmatmul.f32.gmra.mxu0 %v910
        %v1072 = vpop.f32.mrf.mxu0
        %v1073 = vadd.f32 %v1008, %v1072
        %1074 = vmatmul.f32.gmra.mxu0 %v912
        %v1075 = vpop.f32.mrf.mxu0
        %v1076 = vadd.f32 %v1011, %v1075
        %1077 = vmatmul.f32.gmra.mxu0 %v914
        %v1078 = vpop.f32.mrf.mxu0
        %v1079 = vadd.f32 %v1014, %v1078
        %1080 = vdwg.mxu0
        %v1081 = vlaneseq
        %v1082 = vand.u32 %v1081, 127
        %vm1083 = vcmp.lt.s32.totalorder %v1082, 8
        %v1084 = vtanh.pop %v1034
        %v1085 = vtanh.pop %v1037
        %v1086 = vtanh.pop %v1040
        %v1087 = vtanh.pop %v1043
        %v1088 = vtanh.pop %v1046
        %v1089 = vtanh.pop %v1049
        %v1090 = vtanh.pop %v1052
        %v1091 = vtanh.pop %v1055
        %v1092 = vtanh.pop %v1058
        %v1093 = vtanh.pop %v1061
        %v1094 = vtanh.pop %v1064
        %v1095 = vtanh.pop %v1067
        %v1096 = vtanh.pop %v1070
        %v1097 = vtanh.pop %v1073
        %v1098 = vtanh.pop %v1076
        %v1099 = vtanh.pop %v1079
        %v1100 = vsel %vm1083, %v1084, %v1034
        %v1101 = vsel %vm1083, %v1085, %v1037
        %v1102 = vsel %vm1083, %v1086, %v1040
        %v1103 = vsel %vm1083, %v1087, %v1043
        %v1104 = vsel %vm1083, %v1088, %v1046
        %v1105 = vsel %vm1083, %v1089, %v1049
        %v1106 = vsel %vm1083, %v1090, %v1052
        %v1107 = vsel %vm1083, %v1091, %v1055
        %v1108 = vsel %vm1083, %v1092, %v1058
        %v1109 = vsel %vm1083, %v1093, %v1061
        %v1110 = vsel %vm1083, %v1094, %v1064
        %v1111 = vsel %vm1083, %v1095, %v1067
        %v1112 = vsel %vm1083, %v1096, %v1070
        %v1113 = vsel %vm1083, %v1097, %v1073
        %v1114 = vsel %vm1083, %v1098, %v1076
        %v1115 = vsel %vm1083, %v1099, %v1079
        %1116 = vst [vmem:[%s304] sm:$0xff] %v1100
        %1117 = vst [vmem:[%s304 + $0x8] sm:$0xff] %v1101
        %1118 = vst [vmem:[%s304 + $0x10] sm:$0xff] %v1102
        %1119 = vst [vmem:[%s304 + $0x18] sm:$0xff] %v1103
        %1120 = vst [vmem:[%s304 + $0x20] sm:$0xff] %v1104
        %1121 = vst [vmem:[%s304 + $0x28] sm:$0xff] %v1105
        %1122 = vst [vmem:[%s304 + $0x30] sm:$0xff] %v1106
        %1123 = vst [vmem:[%s304 + $0x38] sm:$0xff] %v1107
        %1124 = vst [vmem:[%s304 + $0x40] sm:$0xff] %v1108
        %1125 = vst [vmem:[%s304 + $0x48] sm:$0xff] %v1109
        %1126 = vst [vmem:[%s304 + $0x50] sm:$0xff] %v1110
        %1127 = vst [vmem:[%s304 + $0x58] sm:$0xff] %v1111
        %1128 = vst [vmem:[%s304 + $0x60] sm:$0xff] %v1112
        %1129 = vst [vmem:[%s304 + $0x68] sm:$0xff] %v1113
        %1130 = vst [vmem:[%s304 + $0x70] sm:$0xff] %v1114
        %1131 = vst [vmem:[%s304 + $0x78] sm:$0xff] %v1115
        %s1132 = sand.u32 %s183, 1
        %s1133 = scalar_lea.sflag [#allocation4], %s1132
        %s1134 = sand.u32 %s183, 1
        %s1135 = smul.addr %s1134, 128
        %s1136 = scalar_lea.vmem [#allocation7], %s1135
        // Predicated region
        $region57: #{tpu_custom_call.1} parent=47 // pred_check
          %p1137 = pneg %p193
        $region58: #{tpu_custom_call.1} parent=47 // pred_check_branch
          %1139 = sbr.rel (%p1137) target = $region60
        $region59: #{tpu_custom_call.1} parent=47 // pred_region
          %s1140 = smul.u32 16, %s23
          %1142 = vsyncadd %s1133, 0
          %s1143 = smul.addr %s1140, 8
          %s1144 = scalar_lea.hbm %s7, %s1143
          %s1145 = sshll.u32 %s1136, 4
          %s1146 = int_to_ptr.vmem [resolvable:$true] %s1145
          %s1147 = sshll.u32 %s1144, 4
          %s1148 = int_to_ptr.hbm [resolvable:$true] %s1147
          %1153 = dma.vmem_to_hbm [thread:$0]  %s1146, 2048, %s1148, %s1133, 128, 128, 8
        $region60: #{tpu_custom_call.1} parent=47 // pred_fallthru
          _
      $region48: #{tpu_custom_call.1} parent=5 // pred_fallthru
        _
      %p1154 = scmp.le.s32.totalorder 2, %s18
      // Predicated region
      $region61: #{tpu_custom_call.1} parent=5 // pred_check
        %p1155 = pneg %p1154
      $region62: #{tpu_custom_call.1} parent=5 // pred_check_branch
        %1157 = sbr.rel (%p1155) target = $region64
      $region63: #{tpu_custom_call.1} parent=5 // pred_region
        %s1158 = ssub.s32 %s18, 2
        // Predicated region
        $region65: #{tpu_custom_call.1} parent=63 // pred_check
          %p1159 = pneg %p199
        $region66: #{tpu_custom_call.1} parent=63 // pred_check_branch
          %1161 = sbr.rel (%p1159) target = $region68
        $region67: #{tpu_custom_call.1} parent=63 // pred_region
          %s1162 = sand.u32 %s184, 1
          %s1163 = scalar_lea.sflag [#allocation4], %s1162
          %s1164 = sand.u32 %s184, 1
          %s1165 = smul.addr %s1164, 128
          %s1166 = scalar_lea.vmem [#allocation7], %s1165
          %1168 = dma.done %s1163, 2048
        $region68: #{tpu_custom_call.1} parent=63 // pred_fallthru
          _
      $region64: #{tpu_custom_call.1} parent=5 // pred_fallthru
        _
    $region6: #{tpu_custom_call.1} parent=1 // loop_footer
      %s22 = sadd.s32 1, %s18
    $region7: #{tpu_custom_call.1} parent=1 // loop_footer_branch
      %17 = sbr.rel target = $region3
    $region8: #{tpu_custom_call.1} parent=1 // loop_exit
      _
    %1169 = vsyncpa [#allocation3], 1
    %s1170 = scalar_lea.sflag [#allocation3], 1
    %1171 = vsyncpa %s1170, 1
    %1172 = vsyncpa [#allocation6], 1
    %1173 = vsyncpa [#allocation4], 1
    %s1174 = scalar_lea.sflag [#allocation4], 1
    %1175 = vsyncpa %s1174, 1

</llo_original>
